<compile_context>
chip_gen: v7x
topology: tpu7x:2x2x1
jax: 0.10.0
libtpu: 0.0.40
codegen_flags: <defaults>
</compile_context>

<pallas_src>
import jax
import jax.numpy as jnp
from jax.experimental import pallas as pl
from jax.experimental.pallas import tpu as pltpu


def band_concat_kernel(spectra_ref, band_ref, out_ref):
    """One batch tile of BandConcat.

    spectra_ref: (TB, S)      reflectance values
    band_ref:    (1, S)       raw band wavelengths
    out_ref:     (2, TB, S)   channel-major output:
                              [0] = spectra, [1] = (banddef - 1440) / 600
    """
    spectra = spectra_ref[...]                                 # (TB, S)
    band_norm = (band_ref[...] - 1440.0) * (1.0 / 600.0)       # (1, S)
    # Two plain, full-lane row stores (lane-dense along S).
    out_ref[0] = spectra
    out_ref[1] = jnp.broadcast_to(band_norm, spectra.shape)


def _choose_tb(b, s, itemsize, vmem_budget_bytes=8 * 1024 * 1024):
    """Largest batch tile that is a multiple of 8, divides b, and fits VMEM.

    Per grid step (double-buffered): spectra tile + 2-channel output tile
    ~= 2 * (tb*s + 2*tb*s) * itemsize = 6 * tb * s * itemsize.
    """
    for tb in (1024, 512, 256, 128, 64, 32, 16, 8):
        if b % tb == 0 and 6 * tb * s * itemsize <= vmem_budget_bytes:
            return tb
    return b  # tiny / irregular batch: single full-extent block


def band_concat(spectra, banddef):
    """spectra: (b, s, 1); banddef: (s,) -> (b, s, 2), matching PyTorch."""
    b, s, _ = spectra.shape
    spectra2d = spectra[..., 0]                              # (b, s)
    band2d = banddef.reshape(1, s).astype(spectra.dtype)     # (1, s)

    itemsize = jnp.dtype(spectra.dtype).itemsize
    tb = _choose_tb(b, s, itemsize)
    bytes_accessed = (b * s + s + 2 * b * s) * itemsize

    out_cm = pl.pallas_call(
        band_concat_kernel,
        out_shape=jax.ShapeDtypeStruct((2, b, s), spectra.dtype),
        grid=(b // tb,),
        in_specs=[
            pl.BlockSpec((tb, s), lambda i: (i, 0)),
            pl.BlockSpec((1, s), lambda i: (0, 0)),
        ],
        out_specs=pl.BlockSpec((2, tb, s), lambda i: (0, i, 0)),
        compiler_params=pltpu.CompilerParams(
            dimension_semantics=("parallel",),
        ),
        cost_estimate=pl.CostEstimate(
            flops=2 * b * s,
            transcendentals=0,
            bytes_accessed=bytes_accessed,
        ),
    )(spectra2d, band2d)

    # Channel-major (2, b, s) -> interleaved (b, s, 2); XLA fuses this
    # transpose into the consumer instead of a masked in-kernel store path.
    return jnp.transpose(out_cm, (1, 2, 0))


def _reference(spectra, banddef):
    """Pure-JAX reference of the PyTorch forward."""
    s = banddef.shape[0]
    band_norm = ((banddef - 1440.0) / 600.0).reshape(1, s, 1)
    return jnp.concatenate(
        [spectra, jnp.broadcast_to(band_norm, spectra.shape).astype(spectra.dtype)],
        axis=-1,
    )


if __name__ == "__main__":
    key = jax.random.PRNGKey(0)

    # Small case (block shapes == full array dims).
    k1, _ = jax.random.split(key)
    b, s = 2, 8
    spectra = jax.random.normal(k1, (b, s, 1), dtype=jnp.float32)
    banddef = 1000.0 + 100.0 * jnp.arange(s, dtype=jnp.float32)

    out = jax.block_until_ready(band_concat(spectra, banddef))
    ref = _reference(spectra, banddef)
    assert out.shape == (b, s, 2), out.shape
    assert jnp.allclose(out, ref, atol=1e-6), "mismatch vs reference (small)"

    # Tiled case: exercises the multi-block grid with (8,128)-aligned tiles.
    k2, _ = jax.random.split(k1)
    b2, s2 = 48, 128
    spectra2 = jax.random.normal(k2, (b2, s2, 1), dtype=jnp.float32)
    banddef2 = 400.0 + 10.0 * jnp.arange(s2, dtype=jnp.float32)

    out2 = jax.block_until_ready(band_concat(spectra2, banddef2))
    ref2 = _reference(spectra2, banddef2)
    assert out2.shape == (b2, s2, 2), out2.shape
    assert jnp.allclose(out2, ref2, atol=1e-6), "mismatch vs reference (tiled)"

    print("KERNEL_OK")
</pallas_src>

<mosaic_0001>
module attributes {stable_mosaic.version = 11 : i64} {
  func.func @band_concat_kernel(%arg0: i32, %arg1: memref<2x8xf32, #tpu.memory_space<vmem>>, %arg2: memref<1x8xf32, #tpu.memory_space<vmem>>, %arg3: memref<2x2x8xf32, #tpu.memory_space<vmem>>) attributes {dimension_semantics = [#tpu.dimension_semantics<parallel>], iteration_bounds = array<i64: 1>, scalar_prefetch = 0 : i64, scratch_operands = 0 : i64, tpu.core_type = #tpu.core_type<tc>, window_params = [{transform_indices = @transform_0, window_bounds = array<i64: 2, 8>}, {pipeline_mode = #tpu.pipeline_mode<synchronous>, transform_indices = @transform_1, window_bounds = array<i64: 1, 8>}, {transform_indices = @transform_2, window_bounds = array<i64: 2, 2, 8>}]} {
    %c0 = arith.constant 0 : index
    %c0_0 = arith.constant 0 : index
    %0 = vector.load %arg1[%c0, %c0_0] : memref<2x8xf32, #tpu.memory_space<vmem>>, vector<2x8xf32>
    %c0_1 = arith.constant 0 : index
    %c0_2 = arith.constant 0 : index
    %1 = vector.load %arg2[%c0_1, %c0_2] : memref<1x8xf32, #tpu.memory_space<vmem>>, vector<1x8xf32>
    %cst = arith.constant 1.440000e+03 : f32
    %2 = vector.broadcast %cst : f32 to vector<1x8xf32>
    %3 = arith.subf %1, %2 : vector<1x8xf32>
    %cst_3 = arith.constant 0.00166666671 : f32
    %4 = vector.broadcast %cst_3 : f32 to vector<1x8xf32>
    %5 = arith.mulf %3, %4 : vector<1x8xf32>
    %c0_4 = arith.constant 0 : index
    %c0_5 = arith.constant 0 : index
    %c0_6 = arith.constant 0 : index
    %6 = vector.load %arg3[%c0_4, %c0_5, %c0_6] : memref<2x2x8xf32, #tpu.memory_space<vmem>>, vector<1x2x8xf32>
    %7 = vector.shape_cast %6 : vector<1x2x8xf32> to vector<2x8xf32>
    %8 = vector.shape_cast %0 : vector<2x8xf32> to vector<1x2x8xf32>
    tpu.vector_store %arg3[%c0_4, %c0_5, %c0_6], %8 {strides = array<i32>} : memref<2x2x8xf32, #tpu.memory_space<vmem>>, vector<1x2x8xf32>,
    %9 = vector.shape_cast %5 : vector<1x8xf32> to vector<1x8xf32>
    %10 = vector.broadcast %9 : vector<1x8xf32> to vector<2x8xf32>
    %c1 = arith.constant 1 : index
    %c0_7 = arith.constant 0 : index
    %c0_8 = arith.constant 0 : index
    %11 = vector.load %arg3[%c1, %c0_7, %c0_8] : memref<2x2x8xf32, #tpu.memory_space<vmem>>, vector<1x2x8xf32>
    %12 = vector.shape_cast %11 : vector<1x2x8xf32> to vector<2x8xf32>
    %13 = vector.shape_cast %10 : vector<2x8xf32> to vector<1x2x8xf32>
    tpu.vector_store %arg3[%c1, %c0_7, %c0_8], %13 {strides = array<i32>} : memref<2x2x8xf32, #tpu.memory_space<vmem>>, vector<1x2x8xf32>,
    return
  }
  func.func @transform_0(%arg0: i32) -> (i32, i32) {
    %c0_i32 = arith.constant 0 : i32
    %c0_i32_0 = arith.constant 0 : i32
    return %arg0, %c0_i32 : i32, i32
  }
  func.func @transform_1(%arg0: i32) -> (i32, i32) {
    %c0_i32 = arith.constant 0 : i32
    %c0_i32_0 = arith.constant 0 : i32
    %c0_i32_1 = arith.constant 0 : i32
    return %c0_i32, %c0_i32_0 : i32, i32
  }
  func.func @transform_2(%arg0: i32) -> (i32, i32, i32) {
    %c0_i32 = arith.constant 0 : i32
    %c0_i32_0 = arith.constant 0 : i32
    %c0_i32_1 = arith.constant 0 : i32
    return %c0_i32, %arg0, %c0_i32_0 : i32, i32, i32
  }
}

</mosaic_0001>

<llo_original>
// kernel: tpu_custom_call.1
$region0: #{tpu_custom_call.1}
  #allocation0 [shape = 'u32[]', space=smem, size = 0x4, offset = 0x4, fixed_abs, tag = 'smem constant byte address 0x4 - core index']
  #allocation1 [shape = 'u32[144,128]{1,0:T(1,128)}', space=vmem, size = 0x12000, scoped, tag = 'internal scratch']
  %s0 = inlined_call_operand.hbm [shape: f32[2,8], index: 0, kind: input, shape index: {}]
  %s1 = inlined_call_operand.vmem [shape: f32[1,8], index: 1, kind: input, shape index: {}]
  %s2 = inlined_call_operand.hbm [shape: f32[2,2,8], index: 2, kind: output, shape index: {}]
  %s3 = sld [smem:[#allocation0]]
  $region22: #{tpu_custom_call.1} parent=0
    _
  %s5 = ssub.s32 1, %s3
  %s6 = scalar_select 0, %s5, %s3
  $region1: #{tpu_custom_call.1} parent=0
    #allocation2 [shape = 'u8[1024]{0}', space=vmem, size = 0x400, scoped, tag = 'input window, operand 0, single buffered']
    #allocation3 [shape = 's32[1]{0}', space=sflag, size = 0x4, scoped, tag = 'scoped memory for tpu_custom_call.1']
    #allocation4 [shape = 's32[1]{0}', space=sflag, size = 0x4, scoped, tag = 'scoped memory for tpu_custom_call.1']
    #allocation5 [shape = 'u8[2048]{0}', space=vmem, size = 0x800, scoped, tag = 'output window, operand 0, single buffered']
    %7 = vsyncpa [#allocation3], 0
    %8 = vsyncpa [#allocation4], 0
    // Predicated region
    $region2: #{tpu_custom_call.1} parent=1 // pred_check
      _
    $region3: #{tpu_custom_call.1} parent=1 // pred_check_branch
      %10 = sbr.rel (0) target = $region5
    $region4: #{tpu_custom_call.1} parent=1 // pred_region
      %s12 = ssub.s32 32, 32
      %13 = vsyncadd [#allocation3], %s12
      %s15 = sshll.u32 [#allocation2], 4
      %s16 = int_to_ptr.vmem [resolvable:$true] %s15
      %18 = dma.hbm_to_vmem [thread:$0]  %s0, 32, %s16, [#allocation3]
    $region5: #{tpu_custom_call.1} parent=1 // pred_fallthru
      _
    // Predicated region
    $region6: #{tpu_custom_call.1} parent=1 // pred_check
      _
    $region7: #{tpu_custom_call.1} parent=1 // pred_check_branch
      %20 = sbr.rel (0) target = $region9
    $region8: #{tpu_custom_call.1} parent=1 // pred_region
      _
    $region9: #{tpu_custom_call.1} parent=1 // pred_fallthru
      _
    // Predicated region
    $region10: #{tpu_custom_call.1} parent=1 // pred_check
      _
    $region11: #{tpu_custom_call.1} parent=1 // pred_check_branch
      %22 = sbr.rel (0) target = $region13
    $region12: #{tpu_custom_call.1} parent=1 // pred_region
      %23 = dma.done [#allocation3], 32
    $region13: #{tpu_custom_call.1} parent=1 // pred_fallthru
      _
    %v24 = vld [vmem:[#allocation2] sm:$0x3]
    %v25 = vld [vmem:[%s1] sm:$0x1]
    %v26 = vsub.f32 %v25, 1440.0
    %v27 = vmul.f32 %v26, 0.0016666667
    %vm28 = vcmask 58368
    %29 = vst.msk [vmem:[#allocation5] sm:$0x3] %vm28, %v24
    %v31 = vlaneseq
    %v32 = vshrl.u32 %v31, 7
    %v33 = vsub.s32 0, %v32
    %v34 = vrot.slane %v27, %v33
    %s36 = scalar_lea.vmem [#allocation5], 2
    %37 = vst.msk [vmem:[%s36] sm:$0x3] %vm28, %v34
    // Predicated region
    $region14: #{tpu_custom_call.1} parent=1 // pred_check
      _
    $region15: #{tpu_custom_call.1} parent=1 // pred_check_branch
      %39 = sbr.rel (0) target = $region17
    $region16: #{tpu_custom_call.1} parent=1 // pred_region
      %s41 = ssub.s32 64, 64
      %42 = vsyncadd [#allocation4], %s41
      %s43 = sshll.u32 [#allocation5], 4
      %s44 = int_to_ptr.vmem [resolvable:$true] %s43
      %49 = dma.vmem_to_hbm [thread:$0]  %s44, 64, %s2, [#allocation4], 32, 32, 2
    $region17: #{tpu_custom_call.1} parent=1 // pred_fallthru
      _
    // Predicated region
    $region18: #{tpu_custom_call.1} parent=1 // pred_check
      _
    $region19: #{tpu_custom_call.1} parent=1 // pred_check_branch
      %51 = sbr.rel (0) target = $region21
    $region20: #{tpu_custom_call.1} parent=1 // pred_region
      %52 = dma.done [#allocation4], 64
    $region21: #{tpu_custom_call.1} parent=1 // pred_fallthru
      _
    %53 = vsyncpa [#allocation3], 1
    %54 = vsyncpa [#allocation4], 1

</llo_original>
